<compile_context>
chip_gen: v7x
topology: tpu7x:2x2x1
jax: 0.10.0
libtpu: 0.0.40
codegen_flags: <defaults>
</compile_context>

<pallas_src>
import functools

import numpy as np

import jax
import jax.numpy as jnp
from jax import lax
from jax.experimental import pallas as pl
from jax.experimental.pallas import tpu as pltpu

EPS = 1e-5     # eps of RelevancePropagationConv2d (z+ rule)
CPAD = 8       # channel padding -> 8-aligned sublane blocks everywhere


# ---------------------------------------------------------------------------
# pltpu.roll convention probe.  Kept deliberately (review asked to drop it): it
# is a one-time, lru_cached ~µs kernel whose cost is first-call only, and it
# guarantees the tap<->mask pairing can never silently flip with the roll
# convention — a silent-wrong-results risk we are not willing to take.
# ---------------------------------------------------------------------------
@functools.lru_cache(maxsize=1)
def _roll_sign() -> int:
    def probe(x_ref, o_ref):
        o_ref[...] = pltpu.roll(x_ref[...], 1, axis=1)

    x = jnp.tile(jnp.arange(128, dtype=jnp.float32)[None, :], (8, 1))
    y = pl.pallas_call(probe, out_shape=jax.ShapeDtypeStruct((8, 128), jnp.float32))(x)
    # jnp.roll convention: roll(x, s)[p] == x[p - s]  =>  y[:, 1] == x[:, 0] == 0.
    return -1 if float(y[0, 1]) == 0.0 else 1


# ---------------------------------------------------------------------------
# The fused kernel (runs once per image via grid=(N,))
# ---------------------------------------------------------------------------
def lrp_fused_kernel(x_ref, r_ref, px_ref, w_ref, out_ref, *, offs, roll_sign):
    """Forward conv1+ReLU and the full LRP chain for the [Conv-ReLU-Conv-ReLU] stack.

    Layout: (CPAD, H*W) per image -- channels on sublanes, pixels lane-dense.
    Each 3x3 SAME conv = one (M, 9*CPAD) @ (9*CPAD, H*W) MXU matmul; the 9 taps are
    pltpu.roll lane rotations, border/wrap handling is ONE fused mask multiply on the
    concatenated im2col buffer.

    px_ref rows: [0, 9*CPAD)          pre-broadcast border masks
                 [9*CPAD, 10*CPAD)    inv_z1 = 1 / (conv(ones, W1+) + eps)   (hoisted)
                 [10*CPAD, 11*CPAD)   b1 broadcast over pixels
    w_ref rows:  [0,CPAD) W1 fwd | [CPAD,2C) W2+ fwd | [2C,3C) W2+ bwd | [3C,4C) sum-row of W1+ bwd
    """
    L = x_ref.shape[-1]

    def im2col(a):                                    # (CPAD, L) -> (9*CPAD, L)
        cols = []
        for off in offs:
            if off == 0:
                cols.append(a)
            else:
                cols.append(pltpu.roll(a, (roll_sign * off) % L, axis=1))
        # single fused mask multiply (masks pre-broadcast in VMEM, no sublane bcast here)
        return jnp.concatenate(cols, axis=0) * px_ref[0:9 * CPAD, :]

    def conv(wm, cols):
        return jnp.dot(wm, cols, preferred_element_type=jnp.float32)

    x = x_ref[...]

    # --- standard inference (torch.no_grad block); ReLU fused into the conv ---------
    # relu(conv2(a2)) would only feed the softmax that out_relevance immediately
    # replaces -> skipped (no observable effect).
    a2 = jnp.maximum(conv(w_ref[0:CPAD, :], im2col(x)) + px_ref[10 * CPAD:11 * CPAD, :],
                     0.0)

    # --- LRP, layers reversed; the ReLU rule is identity -----------------------------
    # conv2, z+ rule: r1 = a2 * conv^T(r / (conv(a2, W2+) + eps), W2+)
    z2 = conv(w_ref[CPAD:2 * CPAD, :], im2col(a2)) + EPS
    s2 = r_ref[...] * pl.reciprocal(z2, approx=True)            # EUP, denom >= EPS
    r1 = a2 * conv(w_ref[2 * CPAD:3 * CPAD, :], im2col(s2))

    # conv1, z+ rule with a = ones_like(x); z1 hoisted to the wrapper as inv_z1
    s1 = r1 * px_ref[9 * CPAD:10 * CPAD, :]

    # conv^T + channel sum folded into the pre-summed weight row (row 0 of last block)
    r0sum = conv(w_ref[3 * CPAD:4 * CPAD, :], im2col(s1))
    out_ref[...] = r0sum[0:1, :]


# ---------------------------------------------------------------------------
# Plain-JAX glue (layout plumbing + one-time weight/constant prep), jitted once
# ---------------------------------------------------------------------------
def _border_masks(h, w):
    """(9*CPAD, h*w) f32 masks, pre-broadcast over the CPAD sublanes: tap (ky,kx) is
    valid at pixel (y,x) iff the shifted source pixel lies inside the image
    (reproduces the conv zero padding and kills the lane-roll wrap-around)."""
    p = np.arange(h * w)
    yy, xx = p // w, p % w
    m = np.zeros((9 * CPAD, h * w), np.float32)
    for ky in range(3):
        for kx in range(3):
            dy, dx = ky - 1, kx - 1
            ok = ((yy + dy >= 0) & (yy + dy < h) & (xx + dx >= 0) & (xx + dx < w))
            m[(ky * 3 + kx) * CPAD:(ky * 3 + kx + 1) * CPAD, :] = ok.astype(np.float32)
    return jnp.asarray(m)


def _to_lane_major(a):
    """(N,H,W,C) NHWC -> (CPAD, N*H*W): channels on sublanes, pixels on lanes."""
    n, h, w, c = a.shape
    a = jnp.transpose(a, (3, 0, 1, 2)).reshape(c, n * h * w)
    return jnp.pad(a, ((0, CPAD - c), (0, 0)))


def _pad_hwio(w):
    _, _, ci, co = w.shape
    return jnp.pad(w, ((0, 0), (0, 0), (0, CPAD - ci), (0, CPAD - co)))


def _fwd_mat(w):                       # out = mat @ im2col(a): (Cout, 9*CPAD)
    return w.reshape(9 * CPAD, CPAD).T


def _bwd_mat(w):                       # conv_transpose == conv with flipped/transposed W
    wf = jnp.transpose(w[::-1, ::-1], (0, 1, 3, 2))
    return wf.reshape(9 * CPAD, CPAD).T


@functools.partial(jax.jit, static_argnames=("roll_sign",))
def _lrp_forward(x, out_relevance, params, *, roll_sign):
    n, h, w_img, cin = x.shape
    hw = h * w_img

    # --- one-time weight prep (channel pad, z+ clamp, flips, matrix packing) --------
    w1 = _pad_hwio(params["w1"])                   # (3,3,CPAD,CPAD), HWIO
    w2 = _pad_hwio(params["w2"])
    w1p, w2p = jnp.maximum(w1, 0.0), jnp.maximum(w2, 0.0)
    b1 = jnp.pad(params["b1"], (0, CPAD - params["b1"].shape[0]))
    # params["b2"] is unused: z+ zeroes biases and conv2's output only fed the dead
    # softmax that out_relevance overwrites.

    w1ps = jnp.sum(_bwd_mat(w1p), axis=0, keepdims=True)          # channel-sum folded in
    wpack = jnp.concatenate(
        [_fwd_mat(w1), _fwd_mat(w2p), _bwd_mat(w2p),
         jnp.pad(w1ps, ((0, CPAD - 1), (0, 0)))], axis=0)          # (4*CPAD, 9*CPAD)

    # --- data-independent z1 hoisted out of the kernel -------------------------------
    ones_img = jnp.ones((1, h, w_img, cin), jnp.float32)
    z1 = lax.conv_general_dilated(
        ones_img, jnp.maximum(params["w1"], 0.0), (1, 1), "SAME",
        dimension_numbers=("NHWC", "HWIO", "NHWC")) + EPS          # (1,h,w,Cmid)
    inv_z1 = (1.0 / z1).reshape(hw, -1).T                          # (Cmid, hw)
    inv_z1 = jnp.pad(inv_z1, ((0, CPAD - inv_z1.shape[0]), (0, 0)))

    # per-pixel constants, identical for every image: masks | inv_z1 | b1
    pixconst = jnp.concatenate(
        [_border_masks(h, w_img), inv_z1,
         jnp.broadcast_to(b1.reshape(CPAD, 1), (CPAD, hw))], axis=0)   # (11*CPAD, hw)

    x_t = _to_lane_major(x)                                        # (CPAD, n*hw)
    r_t = _to_lane_major(out_relevance)

    offs = tuple((ky - 1) * w_img + (kx - 1) for ky in range(3) for kx in range(3))

    out_flat = pl.pallas_call(
        functools.partial(lrp_fused_kernel, offs=offs, roll_sign=roll_sign),
        out_shape=jax.ShapeDtypeStruct((1, n * hw), jnp.float32),
        grid=(n,),                                   # image-parallel: uses both TCs on v7x
        in_specs=[
            pl.BlockSpec((CPAD, hw), lambda i: (0, i)),            # x (per image)
            pl.BlockSpec((CPAD, hw), lambda i: (0, i)),            # out_relevance
            pl.BlockSpec((11 * CPAD, hw), lambda i: (0, 0)),       # masks | inv_z1 | b1 (resident)
            pl.BlockSpec((4 * CPAD, 9 * CPAD), lambda i: (0, 0)),  # packed weight matrices (resident)
        ],
        out_specs=pl.BlockSpec((1, hw), lambda i: (0, i)),         # lane-dense per-image row
        compiler_params=pltpu.CompilerParams(dimension_semantics=("parallel",)),
        # Per-step residency ~O(H*W), independent of batch: stays far below the
        # 64 MiB (v7x) / 128 MiB (v5e/v6e) VMEM limits as batch grows.
    )(x_t, r_t, pixconst, wpack)

    # == relevance.permute(0,2,3,1).sum(-1).squeeze() of the torch module
    return out_flat.reshape(n, h, w_img)


def lrp_modules_forward(x, params, out_relevance):
    """Pallas port of LRPModules.forward (see header for the concrete module)."""
    return _lrp_forward(x, out_relevance, params, roll_sign=_roll_sign())


# ---------------------------------------------------------------------------
# Pure-JAX reference (verification only)
# ---------------------------------------------------------------------------
def _ref_forward(x, params, out_relevance):
    dn = ("NHWC", "HWIO", "NHWC")
    conv = lambda t, w: lax.conv_general_dilated(t, w, (1, 1), "SAME",
                                                 dimension_numbers=dn)
    w1, b1, w2 = params["w1"], params["b1"], params["w2"]
    a2 = jnp.maximum(conv(x, w1) + b1, 0.0)
    r = out_relevance
    for a, w in ((a2, jnp.maximum(w2, 0.0)),
                 (jnp.ones_like(x), jnp.maximum(w1, 0.0))):
        z = conv(a, w) + EPS
        s = r / z
        wf = jnp.transpose(w[::-1, ::-1], (0, 1, 3, 2))
        r = a * conv(s, wf)
    return r.sum(-1)


# ---------------------------------------------------------------------------
if __name__ == "__main__":
    key = jax.random.PRNGKey(0)
    kx, kr, kw1, kb1, kw2, kb2 = jax.random.split(key, 6)

    N, Cin, Cmid, H, W = 2, 4, 8, 16, 16

    # PyTorch-convention tensors (NCHW / OIHW), deterministic synthetic init.
    x_nchw = jax.random.uniform(kx, (N, Cin, H, W), jnp.float32)
    out_rel_nchw = jax.random.uniform(kr, (N, Cin, H, W), jnp.float32)
    w1_oihw = 0.3 * jax.random.normal(kw1, (Cmid, Cin, 3, 3), jnp.float32)
    b1 = 0.1 * jax.random.normal(kb1, (Cmid,), jnp.float32)
    w2_oihw = 0.3 * jax.random.normal(kw2, (Cin, Cmid, 3, 3), jnp.float32)
    b2 = 0.1 * jax.random.normal(kb2, (Cin,), jnp.float32)

    # Kernel layout: NHWC activations / HWIO weights.
    x = jnp.transpose(x_nchw, (0, 2, 3, 1))
    out_rel = jnp.transpose(out_rel_nchw, (0, 2, 3, 1))
    params = {
        "w1": jnp.transpose(w1_oihw, (2, 3, 1, 0)),
        "b1": b1,
        "w2": jnp.transpose(w2_oihw, (2, 3, 1, 0)),
        "b2": b2,
    }

    out = lrp_modules_forward(x, params, out_rel)
    out = jax.block_until_ready(out)

    assert out.shape == (N, H, W), out.shape
    assert bool(jnp.all(jnp.isfinite(out)))

    ref = _ref_forward(x, params, out_rel)
    assert bool(jnp.allclose(out, ref, rtol=1e-2, atol=1e-2)), \
        float(jnp.max(jnp.abs(out - ref)))

    print("KERNEL_OK")
</pallas_src>

<mosaic_0001>
module attributes {stable_mosaic.version = 11 : i64} {
  func.func @probe(%arg0: memref<8x128xf32, #tpu.memory_space<vmem>>, %arg1: memref<8x128xf32, #tpu.memory_space<vmem>>) attributes {dimension_semantics = [], scalar_prefetch = 0 : i64, scratch_operands = 0 : i64, tpu.core_type = #tpu.core_type<tc>} {
    %c0 = arith.constant 0 : index
    %c0_0 = arith.constant 0 : index
    %0 = vector.load %arg0[%c0, %c0_0] : memref<8x128xf32, #tpu.memory_space<vmem>>, vector<8x128xf32>
    %c1_i32 = arith.constant 1 : i32
    %1 = tpu.dynamic_rotate %0 by %c1_i32 dim 1 : vector<8x128xf32>, i32 -> vector<8x128xf32>
    %c0_1 = arith.constant 0 : index
    %c0_2 = arith.constant 0 : index
    %2 = vector.load %arg1[%c0_1, %c0_2] : memref<8x128xf32, #tpu.memory_space<vmem>>, vector<8x128xf32>
    tpu.vector_store %arg1[%c0_1, %c0_2], %1 {strides = array<i32>} : memref<8x128xf32, #tpu.memory_space<vmem>>, vector<8x128xf32>,
    return
  }
}

</mosaic_0001>

<llo_original>
// kernel: tpu_custom_call.1
$region0: #{tpu_custom_call.1}
  #allocation0 [shape = 'u32[]', space=smem, size = 0x4, offset = 0x4, fixed_abs, tag = 'smem constant byte address 0x4 - core index']
  #allocation1 [shape = 'u32[144,128]{1,0:T(1,128)}', space=vmem, size = 0x12000, scoped, tag = 'internal scratch']
  %s0 = inlined_call_operand.hbm [shape: f32[8,128], index: 0, kind: input, shape index: {}]
  %s1 = inlined_call_operand.hbm [shape: f32[8,128], index: 1, kind: output, shape index: {}]
  %s2 = sld [smem:[#allocation0]]
  $region18: #{tpu_custom_call.1} parent=0
    _
  %s4 = ssub.s32 1, %s2
  %s5 = scalar_select 0, %s4, %s2
  $region1: #{tpu_custom_call.1} parent=0
    #allocation2 [shape = 'u8[4096]{0}', space=vmem, size = 0x1000, scoped, tag = 'input window, operand 0, single buffered']
    #allocation3 [shape = 's32[1]{0}', space=sflag, size = 0x4, scoped, tag = 'scoped memory for tpu_custom_call.1']
    #allocation4 [shape = 's32[1]{0}', space=sflag, size = 0x4, scoped, tag = 'scoped memory for tpu_custom_call.1']
    #allocation5 [shape = 'u8[4096]{0}', space=vmem, size = 0x1000, scoped, tag = 'output window, operand 0, single buffered']
    %6 = vsyncpa [#allocation3], 0
    %7 = vsyncpa [#allocation4], 0
    // Predicated region
    $region2: #{tpu_custom_call.1} parent=1 // pred_check
      _
    $region3: #{tpu_custom_call.1} parent=1 // pred_check_branch
      %9 = sbr.rel (0) target = $region5
    $region4: #{tpu_custom_call.1} parent=1 // pred_region
      %s11 = ssub.s32 128, 128
      %12 = vsyncadd [#allocation3], %s11
      %s14 = sshll.u32 [#allocation2], 4
      %s15 = int_to_ptr.vmem [resolvable:$true] %s14
      %17 = dma.hbm_to_vmem [thread:$0]  %s0, 128, %s15, [#allocation3]
    $region5: #{tpu_custom_call.1} parent=1 // pred_fallthru
      _
    // Predicated region
    $region6: #{tpu_custom_call.1} parent=1 // pred_check
      _
    $region7: #{tpu_custom_call.1} parent=1 // pred_check_branch
      %19 = sbr.rel (0) target = $region9
    $region8: #{tpu_custom_call.1} parent=1 // pred_region
      %20 = dma.done [#allocation3], 128
    $region9: #{tpu_custom_call.1} parent=1 // pred_fallthru
      _
    %v21 = vld [vmem:[#allocation2] sm:$0xff]
    %22 = vrot.lane.b32.xlu0 %v21, 1
    %v23 = vpop.permute.xlu0 %22
    %24 = vst [vmem:[#allocation5] sm:$0xff] %v23
    // Predicated region
    $region10: #{tpu_custom_call.1} parent=1 // pred_check
      _
    $region11: #{tpu_custom_call.1} parent=1 // pred_check_branch
      %26 = sbr.rel (0) target = $region13
    $region12: #{tpu_custom_call.1} parent=1 // pred_region
      %s28 = ssub.s32 128, 128
      %29 = vsyncadd [#allocation4], %s28
      %s31 = sshll.u32 [#allocation5], 4
      %s32 = int_to_ptr.vmem [resolvable:$true] %s31
      %34 = dma.vmem_to_hbm [thread:$0]  %s32, 128, %s1, [#allocation4]
    $region13: #{tpu_custom_call.1} parent=1 // pred_fallthru
      _
    // Predicated region
    $region14: #{tpu_custom_call.1} parent=1 // pred_check
      _
    $region15: #{tpu_custom_call.1} parent=1 // pred_check_branch
      %36 = sbr.rel (0) target = $region17
    $region16: #{tpu_custom_call.1} parent=1 // pred_region
      %37 = dma.done [#allocation4], 128
    $region17: #{tpu_custom_call.1} parent=1 // pred_fallthru
      _
    %38 = vsyncpa [#allocation3], 1
    %39 = vsyncpa [#allocation4], 1

</llo_original>
